<compile_context>
chip_gen: v5e
topology: v5e:2x2
jax: 0.10.0
libtpu: 0.0.40
codegen_flags: <defaults>
</compile_context>

<pallas_src>
import jax
import jax.numpy as jnp
from jax.experimental import pallas as pl
from jax.experimental.pallas import tpu as pltpu


def _attention_kernel(q_ref, k_ref, pos_ref,
                      wq_ref, wk_ref, wv_ref,
                      w1_ref, b1_ref, w2_ref, b2_ref,
                      wo_ref, bo_ref,
                      o_ref):
    f32 = jnp.float32
    # Blocks are (1, C, T) with tokens on lanes; drop the leading batch dim.
    q = q_ref[0, :, :].astype(f32)      # (C, T)
    k = k_ref[0, :, :].astype(f32)      # (C, T)
    pos = pos_ref[0, :, :].astype(f32)  # (C, T)

    # Projections.  Weights are in PyTorch (out, in) orientation, so y = W @ x.
    # NOTE: the module applies v_fc to the *projected* k:  v = v_fc(k_fc(k)).
    kp = jnp.dot(wk_ref[...], k, preferred_element_type=f32)    # k_fc
    qp = jnp.dot(wq_ref[...], q, preferred_element_type=f32)    # q_fc
    vp = jnp.dot(wv_ref[...], kp, preferred_element_type=f32)   # v_fc(k_fc(k))

    # attn_fc(k - q + pos) -> sigmoid   (dropout == identity in eval mode)
    a = kp - qp + pos
    h = jnp.maximum(
        jnp.dot(w1_ref[...], a, preferred_element_type=f32) + b1_ref[...], 0.0)
    a = jax.nn.sigmoid(
        jnp.dot(w2_ref[...], h, preferred_element_type=f32) + b2_ref[...])

    # (v + pos) * attn  ->  out_fc   (dropout == identity)
    x = (vp + pos) * a
    out = jnp.dot(wo_ref[...], x, preferred_element_type=f32) + bo_ref[...]
    o_ref[0, :, :] = out.astype(o_ref.dtype)


def _pick_token_tile(hw, cap):
    """Largest lane tile that is a multiple of 128 dividing hw (or the full extent)."""
    if hw <= cap or hw % 128 != 0:
        # Full-extent block is always legal (block dim == array dim).
        return hw
    t = (cap // 128) * 128
    while hw % t != 0:
        t -= 128
    return max(t, 128)


def attention_forward(q_nchw, k_nchw, pos_bhwc, params, *, max_tile_tokens=4096):
    """q_nchw, k_nchw: (B, C, H, W); pos_bhwc: (B, H, W, C). Returns (B, C, H, W)."""
    B, C, H, W = q_nchw.shape
    HW = H * W

    wq, wk, wv, w1, b1, w2, b2, wo, bo = params
    Ch = w1.shape[0]  # dim // 2

    # Channel-major token layout.  q/k/out reshapes are free (no data movement);
    # pos arrives channel-last and pays the single accepted transpose.
    q_cm = q_nchw.reshape(B, C, HW)
    k_cm = k_nchw.reshape(B, C, HW)
    pos_cm = jnp.transpose(pos_bhwc, (0, 3, 1, 2)).reshape(B, C, HW)

    tile = _pick_token_tile(HW, max_tile_tokens)
    assert HW % tile == 0
    grid = (B, HW // tile)

    act_spec = pl.BlockSpec((1, C, tile), lambda b, t: (b, 0, t))
    const = lambda shape: pl.BlockSpec(shape, lambda b, t: (0, 0))  # resident weights

    out_cm = pl.pallas_call(
        _attention_kernel,
        out_shape=jax.ShapeDtypeStruct((B, C, HW), q_cm.dtype),
        grid_spec=pltpu.PrefetchScalarGridSpec(
            num_scalar_prefetch=0,
            grid=grid,
            in_specs=[
                act_spec, act_spec, act_spec,                  # q, k, pos
                const((C, C)), const((C, C)), const((C, C)),   # Wq, Wk, Wv
                const((Ch, C)), const((Ch, 1)),                # attn_fc[0]
                const((C, Ch)), const((C, 1)),                 # attn_fc[2]
                const((C, C)), const((C, 1)),                  # out_fc
            ],
            out_specs=act_spec,
        ),
        compiler_params=pltpu.CompilerParams(
            # No reduction axis: both grid axes independent -> megacore on v7x.
            dimension_semantics=("parallel", "parallel"),
            # ~10 MiB needed at tile=4096; 32 MiB is within every generation's
            # physical VMEM (v7x: 64 MiB, v5e/v6e: 128 MiB).
            vmem_limit_bytes=32 * 1024 * 1024),
    )(q_cm, k_cm, pos_cm, wq, wk, wv, w1, b1, w2, b2, wo, bo)

    return out_cm.reshape(B, C, H, W)


def init_params(key, dim):
    """kaiming_normal_ (fan_in, gain=sqrt(2)) weights in PyTorch (out, in) layout,
    zero biases shaped (out, 1) for lane-broadcast in the channel-major kernel."""
    def kaiming(k, out_f, in_f):
        std = (2.0 / in_f) ** 0.5
        return jax.random.normal(k, (out_f, in_f), dtype=jnp.float32) * std

    ks = jax.random.split(key, 6)
    wq = kaiming(ks[0], dim, dim)
    wk = kaiming(ks[1], dim, dim)
    wv = kaiming(ks[2], dim, dim)
    w1 = kaiming(ks[3], dim // 2, dim)
    b1 = jnp.zeros((dim // 2, 1), jnp.float32)
    w2 = kaiming(ks[4], dim, dim // 2)
    b2 = jnp.zeros((dim, 1), jnp.float32)
    wo = kaiming(ks[5], dim, dim)
    bo = jnp.zeros((dim, 1), jnp.float32)
    return (wq, wk, wv, w1, b1, w2, b2, wo, bo)


def _reference(q_nchw, k_nchw, pos_bhwc, params):
    """Pure-JAX transcription of the PyTorch forward (eval mode, mask=None)."""
    wq, wk, wv, w1, b1, w2, b2, wo, bo = params
    q = jnp.transpose(q_nchw, (0, 2, 3, 1))
    k = jnp.transpose(k_nchw, (0, 2, 3, 1))
    qp = q @ wq.T                       # q_fc
    kp = k @ wk.T                       # k_fc
    vp = kp @ wv.T                      # v_fc applied to projected k (as in PyTorch)
    attn = kp - qp + pos_bhwc
    attn = jnp.maximum(attn @ w1.T + b1.T, 0.0) @ w2.T + b2.T
    attn = jax.nn.sigmoid(attn)
    x = (vp + pos_bhwc) * attn
    x = x @ wo.T + bo.T
    return jnp.transpose(x, (0, 3, 1, 2))


if __name__ == "__main__":
    B, C, H, W = 2, 32, 16, 16   # dim = 32, dim // 2 = 16; 256 tokens per image
    key = jax.random.PRNGKey(0)
    kq, kk, kpos, kw = jax.random.split(key, 4)
    q = jax.random.normal(kq, (B, C, H, W), dtype=jnp.float32)
    k = jax.random.normal(kk, (B, C, H, W), dtype=jnp.float32)
    pos = jax.random.normal(kpos, (B, H, W, C), dtype=jnp.float32)
    params = init_params(kw, C)

    out = attention_forward(q, k, pos, params)
    out = jax.block_until_ready(out)

    ref = _reference(q, k, pos, params)
    assert out.shape == (B, C, H, W)
    assert jnp.allclose(out, ref, atol=2e-4, rtol=2e-4), "mismatch vs reference"
    print("KERNEL_OK")
</pallas_src>

<mosaic_0001>
module attributes {stable_mosaic.version = 11 : i64} {
  func.func @_attention_kernel(%arg0: i32, %arg1: i32, %arg2: memref<1x32x256xf32, #tpu.memory_space<vmem>>, %arg3: memref<1x32x256xf32, #tpu.memory_space<vmem>>, %arg4: memref<1x32x256xf32, #tpu.memory_space<vmem>>, %arg5: memref<32x32xf32, #tpu.memory_space<vmem>>, %arg6: memref<32x32xf32, #tpu.memory_space<vmem>>, %arg7: memref<32x32xf32, #tpu.memory_space<vmem>>, %arg8: memref<16x32xf32, #tpu.memory_space<vmem>>, %arg9: memref<16x1xf32, #tpu.memory_space<vmem>>, %arg10: memref<32x16xf32, #tpu.memory_space<vmem>>, %arg11: memref<32x1xf32, #tpu.memory_space<vmem>>, %arg12: memref<32x32xf32, #tpu.memory_space<vmem>>, %arg13: memref<32x1xf32, #tpu.memory_space<vmem>>, %arg14: memref<1x32x256xf32, #tpu.memory_space<vmem>>) attributes {dimension_semantics = [#tpu.dimension_semantics<parallel>, #tpu.dimension_semantics<parallel>], iteration_bounds = array<i64: 2, 1>, scalar_prefetch = 0 : i64, scratch_operands = 0 : i64, tpu.core_type = #tpu.core_type<tc>, window_params = [{transform_indices = @transform_0, window_bounds = array<i64: 1, 32, 256>}, {transform_indices = @transform_1, window_bounds = array<i64: 1, 32, 256>}, {transform_indices = @transform_2, window_bounds = array<i64: 1, 32, 256>}, {pipeline_mode = #tpu.pipeline_mode<synchronous>, transform_indices = @transform_3, window_bounds = array<i64: 32, 32>}, {pipeline_mode = #tpu.pipeline_mode<synchronous>, transform_indices = @transform_4, window_bounds = array<i64: 32, 32>}, {pipeline_mode = #tpu.pipeline_mode<synchronous>, transform_indices = @transform_5, window_bounds = array<i64: 32, 32>}, {pipeline_mode = #tpu.pipeline_mode<synchronous>, transform_indices = @transform_6, window_bounds = array<i64: 16, 32>}, {pipeline_mode = #tpu.pipeline_mode<synchronous>, transform_indices = @transform_7, window_bounds = array<i64: 16, 1>}, {pipeline_mode = #tpu.pipeline_mode<synchronous>, transform_indices = @transform_8, window_bounds = array<i64: 32, 16>}, {pipeline_mode = #tpu.pipeline_mode<synchronous>, transform_indices = @transform_9, window_bounds = array<i64: 32, 1>}, {pipeline_mode = #tpu.pipeline_mode<synchronous>, transform_indices = @transform_10, window_bounds = array<i64: 32, 32>}, {pipeline_mode = #tpu.pipeline_mode<synchronous>, transform_indices = @transform_11, window_bounds = array<i64: 32, 1>}, {transform_indices = @transform_12, window_bounds = array<i64: 1, 32, 256>}]} {
    %c0 = arith.constant 0 : index
    %c0_0 = arith.constant 0 : index
    %c0_1 = arith.constant 0 : index
    %0 = vector.load %arg2[%c0, %c0_0, %c0_1] : memref<1x32x256xf32, #tpu.memory_space<vmem>>, vector<1x32x256xf32>
    %1 = vector.shape_cast %0 : vector<1x32x256xf32> to vector<32x256xf32>
    %c0_2 = arith.constant 0 : index
    %c0_3 = arith.constant 0 : index
    %c0_4 = arith.constant 0 : index
    %2 = vector.load %arg3[%c0_2, %c0_3, %c0_4] : memref<1x32x256xf32, #tpu.memory_space<vmem>>, vector<1x32x256xf32>
    %3 = vector.shape_cast %2 : vector<1x32x256xf32> to vector<32x256xf32>
    %c0_5 = arith.constant 0 : index
    %c0_6 = arith.constant 0 : index
    %c0_7 = arith.constant 0 : index
    %4 = vector.load %arg4[%c0_5, %c0_6, %c0_7] : memref<1x32x256xf32, #tpu.memory_space<vmem>>, vector<1x32x256xf32>
    %5 = vector.shape_cast %4 : vector<1x32x256xf32> to vector<32x256xf32>
    %c0_8 = arith.constant 0 : index
    %c0_9 = arith.constant 0 : index
    %6 = vector.load %arg6[%c0_8, %c0_9] : memref<32x32xf32, #tpu.memory_space<vmem>>, vector<32x32xf32>
    %cst = arith.constant dense<0.000000e+00> : vector<32x256xf32>
    %7 = tpu.matmul %6, %3, %cst {dimension_numbers = #tpu.dot_dimension_numbers<[1], [0], [0], [1], [0, 0, 1, 1], [], []>} : vector<32x32xf32>, vector<32x256xf32>, vector<32x256xf32> -> vector<32x256xf32>
    %c0_10 = arith.constant 0 : index
    %c0_11 = arith.constant 0 : index
    %8 = vector.load %arg5[%c0_10, %c0_11] : memref<32x32xf32, #tpu.memory_space<vmem>>, vector<32x32xf32>
    %cst_12 = arith.constant dense<0.000000e+00> : vector<32x256xf32>
    %9 = tpu.matmul %8, %1, %cst_12 {dimension_numbers = #tpu.dot_dimension_numbers<[1], [0], [0], [1], [0, 0, 1, 1], [], []>} : vector<32x32xf32>, vector<32x256xf32>, vector<32x256xf32> -> vector<32x256xf32>
    %c0_13 = arith.constant 0 : index
    %c0_14 = arith.constant 0 : index
    %10 = vector.load %arg7[%c0_13, %c0_14] : memref<32x32xf32, #tpu.memory_space<vmem>>, vector<32x32xf32>
    %cst_15 = arith.constant dense<0.000000e+00> : vector<32x256xf32>
    %11 = tpu.matmul %10, %7, %cst_15 {dimension_numbers = #tpu.dot_dimension_numbers<[1], [0], [0], [1], [0, 0, 1, 1], [], []>} : vector<32x32xf32>, vector<32x256xf32>, vector<32x256xf32> -> vector<32x256xf32>
    %12 = arith.subf %7, %9 : vector<32x256xf32>
    %13 = arith.addf %12, %5 : vector<32x256xf32>
    %c0_16 = arith.constant 0 : index
    %c0_17 = arith.constant 0 : index
    %14 = vector.load %arg8[%c0_16, %c0_17] : memref<16x32xf32, #tpu.memory_space<vmem>>, vector<16x32xf32>
    %cst_18 = arith.constant dense<0.000000e+00> : vector<16x256xf32>
    %15 = tpu.matmul %14, %13, %cst_18 {dimension_numbers = #tpu.dot_dimension_numbers<[1], [0], [0], [1], [0, 0, 1, 1], [], []>} : vector<16x32xf32>, vector<32x256xf32>, vector<16x256xf32> -> vector<16x256xf32>
    %c0_19 = arith.constant 0 : index
    %c0_20 = arith.constant 0 : index
    %16 = vector.load %arg9[%c0_19, %c0_20] : memref<16x1xf32, #tpu.memory_space<vmem>>, vector<16x1xf32>
    %17 = vector.broadcast %16 : vector<16x1xf32> to vector<16x256xf32>
    %18 = arith.addf %15, %17 : vector<16x256xf32>
    %cst_21 = arith.constant 0.000000e+00 : f32
    %19 = vector.broadcast %cst_21 : f32 to vector<16x256xf32>
    %20 = arith.maximumf %18, %19 : vector<16x256xf32>
    %c0_22 = arith.constant 0 : index
    %c0_23 = arith.constant 0 : index
    %21 = vector.load %arg10[%c0_22, %c0_23] : memref<32x16xf32, #tpu.memory_space<vmem>>, vector<32x16xf32>
    %cst_24 = arith.constant dense<0.000000e+00> : vector<32x256xf32>
    %22 = tpu.matmul %21, %20, %cst_24 {dimension_numbers = #tpu.dot_dimension_numbers<[1], [0], [0], [1], [0, 0, 1, 1], [], []>} : vector<32x16xf32>, vector<16x256xf32>, vector<32x256xf32> -> vector<32x256xf32>
    %c0_25 = arith.constant 0 : index
    %c0_26 = arith.constant 0 : index
    %23 = vector.load %arg11[%c0_25, %c0_26] : memref<32x1xf32, #tpu.memory_space<vmem>>, vector<32x1xf32>
    %24 = vector.broadcast %23 : vector<32x1xf32> to vector<32x256xf32>
    %25 = arith.addf %22, %24 : vector<32x256xf32>
    %26 = arith.negf %25 : vector<32x256xf32>
    %27 = math.exp %26 : vector<32x256xf32>
    %cst_27 = arith.constant 1.000000e+00 : f32
    %28 = vector.broadcast %cst_27 : f32 to vector<32x256xf32>
    %29 = arith.addf %28, %27 : vector<32x256xf32>
    %30 = arith.divf %28, %29 : vector<32x256xf32>
    %31 = arith.addf %11, %5 : vector<32x256xf32>
    %32 = arith.mulf %31, %30 : vector<32x256xf32>
    %c0_28 = arith.constant 0 : index
    %c0_29 = arith.constant 0 : index
    %33 = vector.load %arg12[%c0_28, %c0_29] : memref<32x32xf32, #tpu.memory_space<vmem>>, vector<32x32xf32>
    %cst_30 = arith.constant dense<0.000000e+00> : vector<32x256xf32>
    %34 = tpu.matmul %33, %32, %cst_30 {dimension_numbers = #tpu.dot_dimension_numbers<[1], [0], [0], [1], [0, 0, 1, 1], [], []>} : vector<32x32xf32>, vector<32x256xf32>, vector<32x256xf32> -> vector<32x256xf32>
    %c0_31 = arith.constant 0 : index
    %c0_32 = arith.constant 0 : index
    %35 = vector.load %arg13[%c0_31, %c0_32] : memref<32x1xf32, #tpu.memory_space<vmem>>, vector<32x1xf32>
    %36 = vector.broadcast %35 : vector<32x1xf32> to vector<32x256xf32>
    %37 = arith.addf %34, %36 : vector<32x256xf32>
    %c0_33 = arith.constant 0 : index
    %c0_34 = arith.constant 0 : index
    %c0_35 = arith.constant 0 : index
    %38 = vector.load %arg14[%c0_33, %c0_34, %c0_35] : memref<1x32x256xf32, #tpu.memory_space<vmem>>, vector<1x32x256xf32>
    %39 = vector.shape_cast %38 : vector<1x32x256xf32> to vector<32x256xf32>
    %40 = vector.shape_cast %37 : vector<32x256xf32> to vector<1x32x256xf32>
    tpu.vector_store %arg14[%c0_33, %c0_34, %c0_35], %40 {strides = array<i32>} : memref<1x32x256xf32, #tpu.memory_space<vmem>>, vector<1x32x256xf32>,
    return
  }
  func.func @transform_0(%arg0: i32, %arg1: i32) -> (i32, i32, i32) {
    %c0_i32 = arith.constant 0 : i32
    %c0_i32_0 = arith.constant 0 : i32
    return %arg0, %c0_i32, %arg1 : i32, i32, i32
  }
  func.func @transform_1(%arg0: i32, %arg1: i32) -> (i32, i32, i32) {
    %c0_i32 = arith.constant 0 : i32
    %c0_i32_0 = arith.constant 0 : i32
    return %arg0, %c0_i32, %arg1 : i32, i32, i32
  }
  func.func @transform_2(%arg0: i32, %arg1: i32) -> (i32, i32, i32) {
    %c0_i32 = arith.constant 0 : i32
    %c0_i32_0 = arith.constant 0 : i32
    return %arg0, %c0_i32, %arg1 : i32, i32, i32
  }
  func.func @transform_3(%arg0: i32, %arg1: i32) -> (i32, i32) {
    %c0_i32 = arith.constant 0 : i32
    %c0_i32_0 = arith.constant 0 : i32
    %c0_i32_1 = arith.constant 0 : i32
    return %c0_i32, %c0_i32_0 : i32, i32
  }
  func.func @transform_4(%arg0: i32, %arg1: i32) -> (i32, i32) {
    %c0_i32 = arith.constant 0 : i32
    %c0_i32_0 = arith.constant 0 : i32
    %c0_i32_1 = arith.constant 0 : i32
    return %c0_i32, %c0_i32_0 : i32, i32
  }
  func.func @transform_5(%arg0: i32, %arg1: i32) -> (i32, i32) {
    %c0_i32 = arith.constant 0 : i32
    %c0_i32_0 = arith.constant 0 : i32
    %c0_i32_1 = arith.constant 0 : i32
    return %c0_i32, %c0_i32_0 : i32, i32
  }
  func.func @transform_6(%arg0: i32, %arg1: i32) -> (i32, i32) {
    %c0_i32 = arith.constant 0 : i32
    %c0_i32_0 = arith.constant 0 : i32
    %c0_i32_1 = arith.constant 0 : i32
    return %c0_i32, %c0_i32_0 : i32, i32
  }
  func.func @transform_7(%arg0: i32, %arg1: i32) -> (i32, i32) {
    %c0_i32 = arith.constant 0 : i32
    %c0_i32_0 = arith.constant 0 : i32
    %c0_i32_1 = arith.constant 0 : i32
    return %c0_i32, %c0_i32_0 : i32, i32
  }
  func.func @transform_8(%arg0: i32, %arg1: i32) -> (i32, i32) {
    %c0_i32 = arith.constant 0 : i32
    %c0_i32_0 = arith.constant 0 : i32
    %c0_i32_1 = arith.constant 0 : i32
    return %c0_i32, %c0_i32_0 : i32, i32
  }
  func.func @transform_9(%arg0: i32, %arg1: i32) -> (i32, i32) {
    %c0_i32 = arith.constant 0 : i32
    %c0_i32_0 = arith.constant 0 : i32
    %c0_i32_1 = arith.constant 0 : i32
    return %c0_i32, %c0_i32_0 : i32, i32
  }
  func.func @transform_10(%arg0: i32, %arg1: i32) -> (i32, i32) {
    %c0_i32 = arith.constant 0 : i32
    %c0_i32_0 = arith.constant 0 : i32
    %c0_i32_1 = arith.constant 0 : i32
    return %c0_i32, %c0_i32_0 : i32, i32
  }
  func.func @transform_11(%arg0: i32, %arg1: i32) -> (i32, i32) {
    %c0_i32 = arith.constant 0 : i32
    %c0_i32_0 = arith.constant 0 : i32
    %c0_i32_1 = arith.constant 0 : i32
    return %c0_i32, %c0_i32_0 : i32, i32
  }
  func.func @transform_12(%arg0: i32, %arg1: i32) -> (i32, i32, i32) {
    %c0_i32 = arith.constant 0 : i32
    %c0_i32_0 = arith.constant 0 : i32
    return %arg0, %c0_i32, %arg1 : i32, i32, i32
  }
}

</mosaic_0001>

<llo_original>
// kernel: tpu_custom_call.1
$region0: #{tpu_custom_call.1}
  #allocation0 [shape = 'u32[]', space=smem, size = 0x4, offset = 0x4, fixed_abs, tag = 'smem constant byte address 0x4 - core index']
  #allocation1 [shape = 'u32[72,128]{1,0:T(1,128)}', space=vmem, size = 0x9000, scoped, tag = 'internal scratch']
  %s0 = inlined_call_operand.hbm [shape: f32[2,32,256], index: 0, kind: input, shape index: {}]
  %s1 = inlined_call_operand.hbm [shape: f32[2,32,256], index: 1, kind: input, shape index: {}]
  %s2 = inlined_call_operand.hbm [shape: f32[2,32,256], index: 2, kind: input, shape index: {}]
  %s3 = inlined_call_operand.vmem [shape: f32[32,32], index: 3, kind: input, shape index: {}]
  %s4 = inlined_call_operand.vmem [shape: f32[32,32], index: 4, kind: input, shape index: {}]
  %s5 = inlined_call_operand.vmem [shape: f32[32,32], index: 5, kind: input, shape index: {}]
  %s6 = inlined_call_operand.vmem [shape: f32[16,32], index: 6, kind: input, shape index: {}]
  %s7 = inlined_call_operand.vmem [shape: f32[16,1], index: 7, kind: input, shape index: {}]
  %s8 = inlined_call_operand.vmem [shape: f32[32,16], index: 8, kind: input, shape index: {}]
  %s9 = inlined_call_operand.vmem [shape: f32[32,1], index: 9, kind: input, shape index: {}]
  %s10 = inlined_call_operand.hbm [shape: f32[32,32], index: 10, kind: input, shape index: {}]
  %s11 = inlined_call_operand.vmem [shape: f32[32,1], index: 11, kind: input, shape index: {}]
  %s12 = inlined_call_operand.hbm [shape: f32[2,32,256], index: 12, kind: output, shape index: {}]
  %s13 = sld [smem:[#allocation0]]
  $region97: #{tpu_custom_call.1} parent=0
    _
  %s15 = ssub.s32 1, %s13
  %s16 = scalar_select 0, %s15, %s13
  $region1: #{tpu_custom_call.1} parent=0
    #allocation2 [shape = 'u8[65536]{0}', space=vmem, size = 0x10000, scoped, tag = 'input window, operand 0']
    #allocation3 [shape = 's32[2]{0}', space=sflag, size = 0x8, scoped, tag = 'scoped memory for tpu_custom_call.1']
    #allocation4 [shape = 's32[2]{0}', space=sflag, size = 0x8, scoped, tag = 'scoped memory for tpu_custom_call.1']
    #allocation5 [shape = 'u8[65536]{0}', space=vmem, size = 0x10000, scoped, tag = 'input window, operand 1']
    #allocation6 [shape = 's32[2]{0}', space=sflag, size = 0x8, scoped, tag = 'scoped memory for tpu_custom_call.1']
    #allocation7 [shape = 'u8[65536]{0}', space=vmem, size = 0x10000, scoped, tag = 'input window, operand 2']
    #allocation8 [shape = 'u8[16384]{0}', space=vmem, size = 0x4000, scoped, tag = 'input window, operand 10, single buffered']
    #allocation9 [shape = 's32[1]{0}', space=sflag, size = 0x4, scoped, tag = 'scoped memory for tpu_custom_call.1']
    #allocation10 [shape = 'u8[65536]{0}', space=vmem, size = 0x10000, scoped, tag = 'output window, operand 0']
    %17 = vsyncpa [#allocation3], 0
    %s18 = scalar_lea.sflag [#allocation3], 1
    %19 = vsyncpa %s18, 0
    %20 = vsyncpa [#allocation6], 0
    %s21 = scalar_lea.sflag [#allocation6], 1
    %22 = vsyncpa %s21, 0
    %23 = vsyncpa [#allocation9], 0
    %24 = vsyncpa [#allocation4], 0
    %s25 = scalar_lea.sflag [#allocation4], 1
    %26 = vsyncpa %s25, 0
    loop: start=0, step=1, limit=4
    $region2: #{tpu_custom_call.1} parent=1 // loop_pre_header
      _
    $region3: #{tpu_custom_call.1} parent=1 // loop_header
      %s28 = sphi 0, %s32
      %p29 = scmp.ge.s32.totalorder %s28, 4
      %s35 = sphi 0, %s47
      %s36 = sphi 0, %s43
      %s37 = sphi 0, %s35
      %s38 = sphi 0, %s36
      %s39 = sphi 0, %s37
      %s40 = sphi 0, %s38
      %s52 = sphi 0, %s54
      %s55 = sphi 0, %s52
      %s56 = sphi 0, %s55
      %s72 = sphi 0, %s56
      %s80 = sphi 0, %s82
      %s83 = sphi 0, %s80
      %s84 = sphi 0, %s83
      %s100 = sphi 0, %s84
      %s108 = sphi 0, %s110
      %s111 = sphi 0, %s108
      %s112 = sphi 0, %s111
      %s128 = sphi 0, %s112
      %s132 = sphi 0, %s132
      %s134 = sphi 0, %s132
      %s135 = sphi 0, %s134
      %s149 = sphi 0, %s135
      %s153 = sphi 0, %s153
      %s155 = sphi 0, %s153
      %s156 = sphi 0, %s155
      %s170 = sphi 0, %s156
      %s174 = sphi 0, %s174
      %s176 = sphi 0, %s174
      %s177 = sphi 0, %s176
      %s191 = sphi 0, %s177
      %s195 = sphi 0, %s195
      %s197 = sphi 0, %s195
      %s198 = sphi 0, %s197
      %s212 = sphi 0, %s198
      %s216 = sphi 0, %s216
      %s218 = sphi 0, %s216
      %s219 = sphi 0, %s218
      %s233 = sphi 0, %s219
      %s237 = sphi 0, %s237
      %s239 = sphi 0, %s237
      %s240 = sphi 0, %s239
      %s254 = sphi 0, %s240
      %s258 = sphi 0, %s258
      %s260 = sphi 0, %s258
      %s261 = sphi 0, %s260
      %s275 = sphi 0, %s261
      %s279 = sphi 0, %s279
      %s281 = sphi 0, %s279
      %s282 = sphi 0, %s281
      %s296 = sphi 0, %s282
      %s300 = sphi 0, %s300
      %s302 = sphi 0, %s300
      %s303 = sphi 0, %s302
      %s317 = sphi 0, %s303
      %s325 = sphi 0, %s327
      %s328 = sphi 0, %s325
      %s329 = sphi 0, %s328
      %s345 = sphi 0, %s329
    $region4: #{tpu_custom_call.1} parent=1 // loop_header_branch
      %31 = sbr.rel (%p29) target = $region8
    $region5: #{tpu_custom_call.1} parent=1 // loop_body
      %s33 = ssub.s32 %s28, 1
      %s34 = ssub.s32 %s28, 2
      %s41 = sadd.s32 1, %s36
      %p42 = scmp.ge.s32.totalorder %s41, 1
      %s43 = scalar_select %p42, 0, %s41
      %s44 = sadd.s32 1, %s35
      %s45 = scalar_select %p42, %s44, %s35
      %p46 = scmp.ge.s32.totalorder %s45, 2
      %s47 = scalar_select %p46, 0, %s45
      %s48 = ssub.s32 %s35, %s47
      %s49 = ssub.s32 %s36, %s43
      %s50 = sor.u32 %s48, %s49
      %p51 = scmp.eq.s32.totalorder %s50, 0
      %s53 = sadd.s32 %s52, 1
      %s54 = scalar_select %p51, %s52, %s53
      %p57 = pneg %p51
      %p58 = scmp.eq.s32.totalorder %s28, 1
      %p59 = por %p57, %p58
      %p60 = scmp.ne.s32.totalorder %s52, %s55
      %p61 = scmp.eq.s32.totalorder %s28, 0
      %p62 = por %p60, %p61
      %p63 = scmp.ne.s32.totalorder %s52, %s55
      %p64 = scmp.eq.s32.totalorder %s33, 1
      %p65 = por %p63, %p64
      %p66 = scmp.ne.s32.totalorder %s55, %s56
      %p67 = scmp.eq.s32.totalorder %s33, 0
      %p68 = por %p66, %p67
      %p69 = scmp.ne.s32.totalorder %s55, %s56
      %p70 = scmp.eq.s32.totalorder %s34, 1
      %p71 = por %p69, %p70
      %p73 = scmp.ne.s32.totalorder %s56, %s72
      %p74 = scmp.eq.s32.totalorder %s34, 0
      %p75 = por %p73, %p74
      %s76 = ssub.s32 %s35, %s47
      %s77 = ssub.s32 %s36, %s43
      %s78 = sor.u32 %s76, %s77
      %p79 = scmp.eq.s32.totalorder %s78, 0
      %s81 = sadd.s32 %s80, 1
      %s82 = scalar_select %p79, %s80, %s81
      %p85 = pneg %p79
      %p86 = scmp.eq.s32.totalorder %s28, 1
      %p87 = por %p85, %p86
      %p88 = scmp.ne.s32.totalorder %s80, %s83
      %p89 = scmp.eq.s32.totalorder %s28, 0
      %p90 = por %p88, %p89
      %p91 = scmp.ne.s32.totalorder %s80, %s83
      %p92 = scmp.eq.s32.totalorder %s33, 1
      %p93 = por %p91, %p92
      %p94 = scmp.ne.s32.totalorder %s83, %s84
      %p95 = scmp.eq.s32.totalorder %s33, 0
      %p96 = por %p94, %p95
      %p97 = scmp.ne.s32.totalorder %s83, %s84
      %p98 = scmp.eq.s32.totalorder %s34, 1
      %p99 = por %p97, %p98
      %p101 = scmp.ne.s32.totalorder %s84, %s100
      %p102 = scmp.eq.s32.totalorder %s34, 0
      %p103 = por %p101, %p102
      %s104 = ssub.s32 %s35, %s47
      %s105 = ssub.s32 %s36, %s43
      %s106 = sor.u32 %s104, %s105
      %p107 = scmp.eq.s32.totalorder %s106, 0
      %s109 = sadd.s32 %s108, 1
      %s110 = scalar_select %p107, %s108, %s109
      %p113 = pneg %p107
      %p114 = scmp.eq.s32.totalorder %s28, 1
      %p115 = por %p113, %p114
      %p116 = scmp.ne.s32.totalorder %s108, %s111
      %p117 = scmp.eq.s32.totalorder %s28, 0
      %p118 = por %p116, %p117
      %p119 = scmp.ne.s32.totalorder %s108, %s111
      %p120 = scmp.eq.s32.totalorder %s33, 1
      %p121 = por %p119, %p120
      %p122 = scmp.ne.s32.totalorder %s111, %s112
      %p123 = scmp.eq.s32.totalorder %s33, 0
      %p124 = por %p122, %p123
      %p125 = scmp.ne.s32.totalorder %s111, %s112
      %p126 = scmp.eq.s32.totalorder %s34, 1
      %p127 = por %p125, %p126
      %p129 = scmp.ne.s32.totalorder %s112, %s128
      %p130 = scmp.eq.s32.totalorder %s34, 0
      %p131 = por %p129, %p130
      %s133 = sadd.s32 %s132, 1
      %p136 = scmp.eq.s32.totalorder %s28, 1
      %p137 = scmp.ne.s32.totalorder %s132, %s134
      %p138 = scmp.eq.s32.totalorder %s28, 0
      %p139 = por %p137, %p138
      %p140 = scmp.ne.s32.totalorder %s132, %s134
      %p141 = scmp.eq.s32.totalorder %s33, 1
      %p142 = por %p140, %p141
      %p143 = scmp.ne.s32.totalorder %s134, %s135
      %p144 = scmp.eq.s32.totalorder %s33, 0
      %p145 = por %p143, %p144
      %p146 = scmp.ne.s32.totalorder %s134, %s135
      %p147 = scmp.eq.s32.totalorder %s34, 1
      %p148 = por %p146, %p147
      %p150 = scmp.ne.s32.totalorder %s135, %s149
      %p151 = scmp.eq.s32.totalorder %s34, 0
      %p152 = por %p150, %p151
      %s154 = sadd.s32 %s153, 1
      %p157 = scmp.eq.s32.totalorder %s28, 1
      %p158 = scmp.ne.s32.totalorder %s153, %s155
      %p159 = scmp.eq.s32.totalorder %s28, 0
      %p160 = por %p158, %p159
      %p161 = scmp.ne.s32.totalorder %s153, %s155
      %p162 = scmp.eq.s32.totalorder %s33, 1
      %p163 = por %p161, %p162
      %p164 = scmp.ne.s32.totalorder %s155, %s156
      %p165 = scmp.eq.s32.totalorder %s33, 0
      %p166 = por %p164, %p165
      %p167 = scmp.ne.s32.totalorder %s155, %s156
      %p168 = scmp.eq.s32.totalorder %s34, 1
      %p169 = por %p167, %p168
      %p171 = scmp.ne.s32.totalorder %s156, %s170
      %p172 = scmp.eq.s32.totalorder %s34, 0
      %p173 = por %p171, %p172
      %s175 = sadd.s32 %s174, 1
      %p178 = scmp.eq.s32.totalorder %s28, 1
      %p179 = scmp.ne.s32.totalorder %s174, %s176
      %p180 = scmp.eq.s32.totalorder %s28, 0
      %p181 = por %p179, %p180
      %p182 = scmp.ne.s32.totalorder %s174, %s176
      %p183 = scmp.eq.s32.totalorder %s33, 1
      %p184 = por %p182, %p183
      %p185 = scmp.ne.s32.totalorder %s176, %s177
      %p186 = scmp.eq.s32.totalorder %s33, 0
      %p187 = por %p185, %p186
      %p188 = scmp.ne.s32.totalorder %s176, %s177
      %p189 = scmp.eq.s32.totalorder %s34, 1
      %p190 = por %p188, %p189
      %p192 = scmp.ne.s32.totalorder %s177, %s191
      %p193 = scmp.eq.s32.totalorder %s34, 0
      %p194 = por %p192, %p193
      %s196 = sadd.s32 %s195, 1
      %p199 = scmp.eq.s32.totalorder %s28, 1
      %p200 = scmp.ne.s32.totalorder %s195, %s197
      %p201 = scmp.eq.s32.totalorder %s28, 0
      %p202 = por %p200, %p201
      %p203 = scmp.ne.s32.totalorder %s195, %s197
      %p204 = scmp.eq.s32.totalorder %s33, 1
      %p205 = por %p203, %p204
      %p206 = scmp.ne.s32.totalorder %s197, %s198
      %p207 = scmp.eq.s32.totalorder %s33, 0
      %p208 = por %p206, %p207
      %p209 = scmp.ne.s32.totalorder %s197, %s198
      %p210 = scmp.eq.s32.totalorder %s34, 1
      %p211 = por %p209, %p210
      %p213 = scmp.ne.s32.totalorder %s198, %s212
      %p214 = scmp.eq.s32.totalorder %s34, 0
      %p215 = por %p213, %p214
      %s217 = sadd.s32 %s216, 1
      %p220 = scmp.eq.s32.totalorder %s28, 1
      %p221 = scmp.ne.s32.totalorder %s216, %s218
      %p222 = scmp.eq.s32.totalorder %s28, 0
      %p223 = por %p221, %p222
      %p224 = scmp.ne.s32.totalorder %s216, %s218
      %p225 = scmp.eq.s32.totalorder %s33, 1
      %p226 = por %p224, %p225
      %p227 = scmp.ne.s32.totalorder %s218, %s219
      %p228 = scmp.eq.s32.totalorder %s33, 0
      %p229 = por %p227, %p228
      %p230 = scmp.ne.s32.totalorder %s218, %s219
      %p231 = scmp.eq.s32.totalorder %s34, 1
      %p232 = por %p230, %p231
      %p234 = scmp.ne.s32.totalorder %s219, %s233
      %p235 = scmp.eq.s32.totalorder %s34, 0
      %p236 = por %p234, %p235
      %s238 = sadd.s32 %s237, 1
      %p241 = scmp.eq.s32.totalorder %s28, 1
      %p242 = scmp.ne.s32.totalorder %s237, %s239
      %p243 = scmp.eq.s32.totalorder %s28, 0
      %p244 = por %p242, %p243
      %p245 = scmp.ne.s32.totalorder %s237, %s239
      %p246 = scmp.eq.s32.totalorder %s33, 1
      %p247 = por %p245, %p246
      %p248 = scmp.ne.s32.totalorder %s239, %s240
      %p249 = scmp.eq.s32.totalorder %s33, 0
      %p250 = por %p248, %p249
      %p251 = scmp.ne.s32.totalorder %s239, %s240
      %p252 = scmp.eq.s32.totalorder %s34, 1
      %p253 = por %p251, %p252
      %p255 = scmp.ne.s32.totalorder %s240, %s254
      %p256 = scmp.eq.s32.totalorder %s34, 0
      %p257 = por %p255, %p256
      %s259 = sadd.s32 %s258, 1
      %p262 = scmp.eq.s32.totalorder %s28, 1
      %p263 = scmp.ne.s32.totalorder %s258, %s260
      %p264 = scmp.eq.s32.totalorder %s28, 0
      %p265 = por %p263, %p264
      %p266 = scmp.ne.s32.totalorder %s258, %s260
      %p267 = scmp.eq.s32.totalorder %s33, 1
      %p268 = por %p266, %p267
      %p269 = scmp.ne.s32.totalorder %s260, %s261
      %p270 = scmp.eq.s32.totalorder %s33, 0
      %p271 = por %p269, %p270
      %p272 = scmp.ne.s32.totalorder %s260, %s261
      %p273 = scmp.eq.s32.totalorder %s34, 1
      %p274 = por %p272, %p273
      %p276 = scmp.ne.s32.totalorder %s261, %s275
      %p277 = scmp.eq.s32.totalorder %s34, 0
      %p278 = por %p276, %p277
      %s280 = sadd.s32 %s279, 1
      %p283 = scmp.eq.s32.totalorder %s28, 1
      %p284 = scmp.ne.s32.totalorder %s279, %s281
      %p285 = scmp.eq.s32.totalorder %s28, 0
      %p286 = por %p284, %p285
      %p287 = scmp.ne.s32.totalorder %s279, %s281
      %p288 = scmp.eq.s32.totalorder %s33, 1
      %p289 = por %p287, %p288
      %p290 = scmp.ne.s32.totalorder %s281, %s282
      %p291 = scmp.eq.s32.totalorder %s33, 0
      %p292 = por %p290, %p291
      %p293 = scmp.ne.s32.totalorder %s281, %s282
      %p294 = scmp.eq.s32.totalorder %s34, 1
      %p295 = por %p293, %p294
      %p297 = scmp.ne.s32.totalorder %s282, %s296
      %p298 = scmp.eq.s32.totalorder %s34, 0
      %p299 = por %p297, %p298
      %s301 = sadd.s32 %s300, 1
      %p304 = scmp.eq.s32.totalorder %s28, 1
      %p305 = scmp.ne.s32.totalorder %s300, %s302
      %p306 = scmp.eq.s32.totalorder %s28, 0
      %p307 = por %p305, %p306
      %p308 = scmp.ne.s32.totalorder %s300, %s302
      %p309 = scmp.eq.s32.totalorder %s33, 1
      %p310 = por %p308, %p309
      %p311 = scmp.ne.s32.totalorder %s302, %s303
      %p312 = scmp.eq.s32.totalorder %s33, 0
      %p313 = por %p311, %p312
      %p314 = scmp.ne.s32.totalorder %s302, %s303
      %p315 = scmp.eq.s32.totalorder %s34, 1
      %p316 = por %p314, %p315
      %p318 = scmp.ne.s32.totalorder %s303, %s317
      %p319 = scmp.eq.s32.totalorder %s34, 0
      %p320 = por %p318, %p319
      %s321 = ssub.s32 %s35, %s47
      %s322 = ssub.s32 %s36, %s43
      %s323 = sor.u32 %s321, %s322
      %p324 = scmp.eq.s32.totalorder %s323, 0
      %s326 = sadd.s32 %s325, 1
      %s327 = scalar_select %p324, %s325, %s326
      %p330 = pneg %p324
      %p331 = scmp.eq.s32.totalorder %s28, 1
      %p332 = por %p330, %p331
      %p333 = scmp.ne.s32.totalorder %s325, %s328
      %p334 = scmp.eq.s32.totalorder %s28, 0
      %p335 = por %p333, %p334
      %p336 = scmp.ne.s32.totalorder %s325, %s328
      %p337 = scmp.eq.s32.totalorder %s33, 1
      %p338 = por %p336, %p337
      %p339 = scmp.ne.s32.totalorder %s328, %s329
      %p340 = scmp.eq.s32.totalorder %s33, 0
      %p341 = por %p339, %p340
      %p342 = scmp.ne.s32.totalorder %s328, %s329
      %p343 = scmp.eq.s32.totalorder %s34, 1
      %p344 = por %p342, %p343
      %p346 = scmp.ne.s32.totalorder %s329, %s345
      %p347 = scmp.eq.s32.totalorder %s34, 0
      %p348 = por %p346, %p347
      %p349 = scmp.le.s32.totalorder 1, %s28
      %p350 = scmp.lt.s32.totalorder %s28, 3
      %p351 = pnand %p349, %p350
      %p352 = pneg %p351
      // Predicated region
      $region9: #{tpu_custom_call.1} parent=5 // pred_check
        _
      $region10: #{tpu_custom_call.1} parent=5 // pred_check_branch
        %354 = sbr.rel (%p351) target = $region12
      $region11: #{tpu_custom_call.1} parent=5 // pred_region
        %s355 = ssub.s32 %s28, 1
        // Predicated region
        $region13: #{tpu_custom_call.1} parent=11 // pred_check
          %p356 = pneg %p145
        $region14: #{tpu_custom_call.1} parent=11 // pred_check_branch
          %358 = sbr.rel (%p356) target = $region16
        $region15: #{tpu_custom_call.1} parent=11 // pred_region
          _
        $region16: #{tpu_custom_call.1} parent=11 // pred_fallthru
          _
        // Predicated region
        $region17: #{tpu_custom_call.1} parent=11 // pred_check
          %p359 = pneg %p166
        $region18: #{tpu_custom_call.1} parent=11 // pred_check_branch
          %361 = sbr.rel (%p359) target = $region20
        $region19: #{tpu_custom_call.1} parent=11 // pred_region
          _
        $region20: #{tpu_custom_call.1} parent=11 // pred_fallthru
          _
        // Predicated region
        $region21: #{tpu_custom_call.1} parent=11 // pred_check
          %p362 = pneg %p187
        $region22: #{tpu_custom_call.1} parent=11 // pred_check_branch
          %364 = sbr.rel (%p362) target = $region24
        $region23: #{tpu_custom_call.1} parent=11 // pred_region
          _
        $region24: #{tpu_custom_call.1} parent=11 // pred_fallthru
          _
        // Predicated region
        $region25: #{tpu_custom_call.1} parent=11 // pred_check
          %p365 = pneg %p208
        $region26: #{tpu_custom_call.1} parent=11 // pred_check_branch
          %367 = sbr.rel (%p365) target = $region28
        $region27: #{tpu_custom_call.1} parent=11 // pred_region
          _
        $region28: #{tpu_custom_call.1} parent=11 // pred_fallthru
          _
        // Predicated region
        $region29: #{tpu_custom_call.1} parent=11 // pred_check
          %p368 = pneg %p229
        $region30: #{tpu_custom_call.1} parent=11 // pred_check_branch
          %370 = sbr.rel (%p368) target = $region32
        $region31: #{tpu_custom_call.1} parent=11 // pred_region
          _
        $region32: #{tpu_custom_call.1} parent=11 // pred_fallthru
          _
        // Predicated region
        $region33: #{tpu_custom_call.1} parent=11 // pred_check
          %p371 = pneg %p250
        $region34: #{tpu_custom_call.1} parent=11 // pred_check_branch
          %373 = sbr.rel (%p371) target = $region36
        $region35: #{tpu_custom_call.1} parent=11 // pred_region
          _
        $region36: #{tpu_custom_call.1} parent=11 // pred_fallthru
          _
        // Predicated region
        $region37: #{tpu_custom_call.1} parent=11 // pred_check
          %p374 = pneg %p271
        $region38: #{tpu_custom_call.1} parent=11 // pred_check_branch
          %376 = sbr.rel (%p374) target = $region40
        $region39: #{tpu_custom_call.1} parent=11 // pred_region
          _
        $region40: #{tpu_custom_call.1} parent=11 // pred_fallthru
          _
        // Predicated region
        $region41: #{tpu_custom_call.1} parent=11 // pred_check
          %p377 = pneg %p292
        $region42: #{tpu_custom_call.1} parent=11 // pred_check_branch
          %379 = sbr.rel (%p377) target = $region44
        $region43: #{tpu_custom_call.1} parent=11 // pred_region
          %381 = vsyncadd [#allocation9], 0
          %s382 = sshll.u32 %s10, 4
          %s383 = int_to_ptr.hbm [resolvable:$true] %s382
          %s384 = sshll.u32 [#allocation8], 4
          %s385 = int_to_ptr.vmem [resolvable:$true] %s384
          %390 = dma.hbm_to_vmem [thread:$0]  %s383, 512, %s385, [#allocation9], 128, 128, 8
        $region44: #{tpu_custom_call.1} parent=11 // pred_fallthru
          _
        // Predicated region
        $region45: #{tpu_custom_call.1} parent=11 // pred_check
          %p391 = pneg %p313
        $region46: #{tpu_custom_call.1} parent=11 // pred_check_branch
          %393 = sbr.rel (%p391) target = $region48
        $region47: #{tpu_custom_call.1} parent=11 // pred_region
          _
        $region48: #{tpu_custom_call.1} parent=11 // pred_fallthru
          _
      $region12: #{tpu_custom_call.1} parent=5 // pred_fallthru
        _
      %p394 = scmp.lt.s32.totalorder %s28, 2
      // Predicated region
      $region49: #{tpu_custom_call.1} parent=5 // pred_check
        %p395 = pneg %p394
      $region50: #{tpu_custom_call.1} parent=5 // pred_check_branch
        %397 = sbr.rel (%p395) target = $region52
      $region51: #{tpu_custom_call.1} parent=5 // pred_region
        // Predicated region
        $region53: #{tpu_custom_call.1} parent=51 // pred_check
          %p398 = pneg %p62
        $region54: #{tpu_custom_call.1} parent=51 // pred_check_branch
          %400 = sbr.rel (%p398) target = $region56
        $region55: #{tpu_custom_call.1} parent=51 // pred_region
          %s401 = sand.u32 %s52, 1
          %s402 = scalar_lea.sflag [#allocation3], %s401
          %s403 = sand.u32 %s52, 1
          %s404 = smul.addr %s403, 64
          %s405 = scalar_lea.vmem [#allocation2], %s404
          %s406 = smul.u32 2, %s36
          %408 = vsyncadd %s402, 0
          %s409 = smul.addr %s35, 8
          %s410 = sadd.s32 %s406, %s409
          %s411 = smul.addr %s410, 8
          %s412 = scalar_lea.hbm %s0, %s411
          %s413 = sshll.u32 %s412, 4
          %s414 = int_to_ptr.hbm [resolvable:$true] %s413
          %s415 = sshll.u32 %s405, 4
          %s416 = int_to_ptr.vmem [resolvable:$true] %s415
          %421 = dma.hbm_to_vmem [thread:$0]  %s414, 1024, %s416, %s402, 256, 256, 16
        $region56: #{tpu_custom_call.1} parent=51 // pred_fallthru
          _
        // Predicated region
        $region57: #{tpu_custom_call.1} parent=51 // pred_check
          %p422 = pneg %p90
        $region58: #{tpu_custom_call.1} parent=51 // pred_check_branch
          %424 = sbr.rel (%p422) target = $region60
        $region59: #{tpu_custom_call.1} parent=51 // pred_region
          %s425 = sand.u32 %s28, 1
          %s426 = scalar_lea.sflag [#allocation6], %s425
          %s427 = sand.u32 %s80, 1
          %s428 = smul.addr %s427, 64
          %s429 = scalar_lea.vmem [#allocation5], %s428
          %s430 = smul.u32 2, %s36
          %432 = vsyncadd %s426, 0
          %s433 = smul.addr %s35, 8
          %s434 = sadd.s32 %s430, %s433
          %s435 = smul.addr %s434, 8
          %s436 = scalar_lea.hbm %s1, %s435
          %s437 = sshll.u32 %s436, 4
          %s438 = int_to_ptr.hbm [resolvable:$true] %s437
          %s439 = sshll.u32 %s429, 4
          %s440 = int_to_ptr.vmem [resolvable:$true] %s439
          %445 = dma.hbm_to_vmem [thread:$0]  %s438, 1024, %s440, %s426, 256, 256, 16
        $region60: #{tpu_custom_call.1} parent=51 // pred_fallthru
          _
        // Predicated region
        $region61: #{tpu_custom_call.1} parent=51 // pred_check
          %p446 = pneg %p118
        $region62: #{tpu_custom_call.1} parent=51 // pred_check_branch
          %448 = sbr.rel (%p446) target = $region64
        $region63: #{tpu_custom_call.1} parent=51 // pred_region
          %s449 = sand.u32 %s28, 1
          %s450 = scalar_lea.sflag [#allocation6], %s449
          %s451 = sand.u32 %s108, 1
          %s452 = smul.addr %s451, 64
          %s453 = scalar_lea.vmem [#allocation7], %s452
          %s454 = smul.u32 2, %s36
          %456 = vsyncadd %s450, 0
          %s457 = smul.addr %s35, 8
          %s458 = sadd.s32 %s454, %s457
          %s459 = smul.addr %s458, 8
          %s460 = scalar_lea.hbm %s2, %s459
          %s461 = sshll.u32 %s460, 4
          %s462 = int_to_ptr.hbm [resolvable:$true] %s461
          %s463 = sshll.u32 %s453, 4
          %s464 = int_to_ptr.vmem [resolvable:$true] %s463
          %469 = dma.hbm_to_vmem [thread:$0]  %s462, 1024, %s464, %s450, 256, 256, 16
        $region64: #{tpu_custom_call.1} parent=51 // pred_fallthru
          _
      $region52: #{tpu_custom_call.1} parent=5 // pred_fallthru
        _
      %p470 = scmp.le.s32.totalorder 1, %s28
      %p471 = scmp.lt.s32.totalorder %s28, 3
      %p472 = pnand %p470, %p471
      %p473 = pneg %p472
      // Predicated region
      $region65: #{tpu_custom_call.1} parent=5 // pred_check
        _
      $region66: #{tpu_custom_call.1} parent=5 // pred_check_branch
        %475 = sbr.rel (%p472) target = $region68
      $region67: #{tpu_custom_call.1} parent=5 // pred_region
        %s476 = ssub.s32 %s28, 1
        %s477 = sand.u32 %s55, 1
        %s478 = scalar_lea.sflag [#allocation3], %s477
        %s479 = sand.u32 %s55, 1
        %s480 = smul.addr %s479, 64
        %s481 = scalar_lea.vmem [#allocation2], %s480
        // Predicated region
        $region69: #{tpu_custom_call.1} parent=67 // pred_check
          %p482 = pneg %p68
        $region70: #{tpu_custom_call.1} parent=67 // pred_check_branch
          %484 = sbr.rel (%p482) target = $region72
        $region71: #{tpu_custom_call.1} parent=67 // pred_region
          %486 = dma.done %s478, 1024
        $region72: #{tpu_custom_call.1} parent=67 // pred_fallthru
          _
        %s487 = sand.u32 %s33, 1
        %s488 = scalar_lea.sflag [#allocation6], %s487
        %s489 = sand.u32 %s83, 1
        %s490 = smul.addr %s489, 64
        %s491 = scalar_lea.vmem [#allocation5], %s490
        // Predicated region
        $region73: #{tpu_custom_call.1} parent=67 // pred_check
          %p492 = pneg %p96
        $region74: #{tpu_custom_call.1} parent=67 // pred_check_branch
          %494 = sbr.rel (%p492) target = $region76
        $region75: #{tpu_custom_call.1} parent=67 // pred_region
          %496 = dma.done %s488, 1024
        $region76: #{tpu_custom_call.1} parent=67 // pred_fallthru
          _
        %s497 = sand.u32 %s33, 1
        %s498 = scalar_lea.sflag [#allocation6], %s497
        %s499 = sand.u32 %s111, 1
        %s500 = smul.addr %s499, 64
        %s501 = scalar_lea.vmem [#allocation7], %s500
        // Predicated region
        $region77: #{tpu_custom_call.1} parent=67 // pred_check
          %p502 = pneg %p124
        $region78: #{tpu_custom_call.1} parent=67 // pred_check_branch
          %504 = sbr.rel (%p502) target = $region80
        $region79: #{tpu_custom_call.1} parent=67 // pred_region
          %506 = dma.done %s498, 1024
        $region80: #{tpu_custom_call.1} parent=67 // pred_fallthru
          _
        // Predicated region
        $region81: #{tpu_custom_call.1} parent=67 // pred_check
          %p507 = pneg %p292
        $region82: #{tpu_custom_call.1} parent=67 // pred_check_branch
          %509 = sbr.rel (%p507) target = $region84
        $region83: #{tpu_custom_call.1} parent=67 // pred_region
          %511 = dma.done [#allocation9], 512
        $region84: #{tpu_custom_call.1} parent=67 // pred_fallthru
          _
        %s512 = sand.u32 %s55, 1
        %s513 = scalar_lea.sflag [#allocation3], %s512
        %s514 = sand.u32 %s55, 1
        %s515 = smul.addr %s514, 64
        %s516 = scalar_lea.vmem [#allocation2], %s515
        %p517 = pneg %p68
        %p518 = pneg %p65
        %s519 = sand.u32 %s33, 1
        %s520 = scalar_lea.sflag [#allocation6], %s519
        %s521 = sand.u32 %s83, 1
        %s522 = smul.addr %s521, 64
        %s523 = scalar_lea.vmem [#allocation5], %s522
        %p524 = pneg %p96
        %p525 = pneg %p93
        %s526 = sand.u32 %s33, 1
        %s527 = scalar_lea.sflag [#allocation6], %s526
        %s528 = sand.u32 %s111, 1
        %s529 = smul.addr %s528, 64
        %s530 = scalar_lea.vmem [#allocation7], %s529
        %p531 = pneg %p124
        %p532 = pneg %p121
        %p533 = pneg %p145
        %p534 = pneg %p142
        %p535 = pneg %p166
        %p536 = pneg %p163
        %p537 = pneg %p187
        %p538 = pneg %p184
        %p539 = pneg %p208
        %p540 = pneg %p205
        %p541 = pneg %p229
        %p542 = pneg %p226
        %p543 = pneg %p250
        %p544 = pneg %p247
        %p545 = pneg %p271
        %p546 = pneg %p268
        %p547 = pneg %p292
        %p548 = pneg %p289
        %p549 = pneg %p313
        %p550 = pneg %p310
        %p551 = pneg %p341
        %p552 = pneg %p338
        %s553 = sand.u32 %s328, 1
        %s554 = scalar_lea.sflag [#allocation4], %s553
        %s555 = sand.u32 %s328, 1
        %s556 = smul.addr %s555, 64
        %s557 = scalar_lea.vmem [#allocation10], %s556
        %s558 = smul.u32 2, %s38
        %s559 = smul.u32 2, %s38
        %s560 = smul.u32 2, %s38
        %s561 = smul.u32 2, %s38
        %v562 = vld [vmem:[%s481] sm:$0xff]
        %v563 = vld [vmem:[%s481 + $0x8] sm:$0xff]
        %v564 = vld [vmem:[%s481 + $0x10] sm:$0xff]
        %v565 = vld [vmem:[%s481 + $0x18] sm:$0xff]
        %v566 = vld [vmem:[%s481 + $0x20] sm:$0xff]
        %v567 = vld [vmem:[%s481 + $0x28] sm:$0xff]
        %v568 = vld [vmem:[%s481 + $0x30] sm:$0xff]
        %v569 = vld [vmem:[%s481 + $0x38] sm:$0xff]
        %v570 = vld [vmem:[%s491] sm:$0xff]
        %v571 = vld [vmem:[%s491 + $0x8] sm:$0xff]
        %v572 = vld [vmem:[%s491 + $0x10] sm:$0xff]
        %v573 = vld [vmem:[%s491 + $0x18] sm:$0xff]
        %v574 = vld [vmem:[%s491 + $0x20] sm:$0xff]
        %v575 = vld [vmem:[%s491 + $0x28] sm:$0xff]
        %v576 = vld [vmem:[%s491 + $0x30] sm:$0xff]
        %v577 = vld [vmem:[%s491 + $0x38] sm:$0xff]
        %v578 = vld [vmem:[%s501] sm:$0xff]
        %v579 = vld [vmem:[%s501 + $0x8] sm:$0xff]
        %v580 = vld [vmem:[%s501 + $0x10] sm:$0xff]
        %v581 = vld [vmem:[%s501 + $0x18] sm:$0xff]
        %v582 = vld [vmem:[%s501 + $0x20] sm:$0xff]
        %v583 = vld [vmem:[%s501 + $0x28] sm:$0xff]
        %v584 = vld [vmem:[%s501 + $0x30] sm:$0xff]
        %v585 = vld [vmem:[%s501 + $0x38] sm:$0xff]
        %v586 = vld [vmem:[%s4] sm:$0xff]
        %v587 = vld [vmem:[%s4 + $0x8] sm:$0xff]
        %v588 = vld [vmem:[%s4 + $0x10] sm:$0xff]
        %v589 = vld [vmem:[%s4 + $0x18] sm:$0xff]
        %vm590 = vcmask 261120
        %v592 = vsel %vm590, %v586, 0
        %v595 = vsel %vm590, %v587, 0
        %v598 = vsel %vm590, %v588, 0
        %v601 = vsel %vm590, %v589, 0
        %603 = vmatpush.msra.mxu0 0.0
        %604 = vmatpush.msra.mxu0 0.0
        %605 = vmatpush.msra.mxu0 0.0
        %606 = vmatpush.msra.mxu0 0.0
        %607 = vmatpush.msra.mxu0 0.0
        %608 = vmatpush.msra.mxu0 0.0
        %609 = vmatpush.msra.mxu0 0.0
        %610 = vmatpush.msra.mxu0 0.0
        %611 = vmatpush.msra.mxu0 0.0
        %612 = vmatpush.msra.mxu0 0.0
        %613 = vmatpush.msra.mxu0 0.0
        %614 = vmatpush.msra.mxu0 0.0
        %615 = vmatpush.msra.mxu0 %v576
        %616 = vmatpush.msra.mxu0 %v574
        %617 = vmatpush.msra.mxu0 %v572
        %618 = vmatpush.msra.mxu0 %v570
        %619 = vmatmul.f32.gmra.mxu0 %v592
        %v620 = vpop.f32.mrf.mxu0
        %v621 = vadd.f32 0.0, %v620
        %622 = vmatmul.f32.gmra.mxu0 %v595
        %v623 = vpop.f32.mrf.mxu0
        %v624 = vadd.f32 0.0, %v623
        %625 = vmatmul.f32.gmra.mxu0 %v598
        %v626 = vpop.f32.mrf.mxu0
        %v627 = vadd.f32 0.0, %v626
        %628 = vmatmul.f32.gmra.mxu0 %v601
        %v629 = vpop.f32.mrf.mxu0
        %v630 = vadd.f32 0.0, %v629
        %631 = vdwg.mxu0
        %632 = vmatpush.msra.mxu0 0.0
        %633 = vmatpush.msra.mxu0 0.0
        %634 = vmatpush.msra.mxu0 0.0
        %635 = vmatpush.msra.mxu0 0.0
        %636 = vmatpush.msra.mxu0 0.0
        %637 = vmatpush.msra.mxu0 0.0
        %638 = vmatpush.msra.mxu0 0.0
        %639 = vmatpush.msra.mxu0 0.0
        %640 = vmatpush.msra.mxu0 0.0
        %641 = vmatpush.msra.mxu0 0.0
        %642 = vmatpush.msra.mxu0 0.0
        %643 = vmatpush.msra.mxu0 0.0
        %644 = vmatpush.msra.mxu0 %v577
        %645 = vmatpush.msra.mxu0 %v575
        %646 = vmatpush.msra.mxu0 %v573
        %647 = vmatpush.msra.mxu0 %v571
        %648 = vmatmul.f32.gmra.mxu0 %v592
        %v649 = vpop.f32.mrf.mxu0
        %v650 = vadd.f32 0.0, %v649
        %651 = vmatmul.f32.gmra.mxu0 %v595
        %v652 = vpop.f32.mrf.mxu0
        %v653 = vadd.f32 0.0, %v652
        %654 = vmatmul.f32.gmra.mxu0 %v598
        %v655 = vpop.f32.mrf.mxu0
        %v656 = vadd.f32 0.0, %v655
        %657 = vmatmul.f32.gmra.mxu0 %v601
        %v658 = vpop.f32.mrf.mxu0
        %v659 = vadd.f32 0.0, %v658
        %660 = vdwg.mxu0
        %v661 = vld [vmem:[%s3] sm:$0xff]
        %v662 = vld [vmem:[%s3 + $0x8] sm:$0xff]
        %v663 = vld [vmem:[%s3 + $0x10] sm:$0xff]
        %v664 = vld [vmem:[%s3 + $0x18] sm:$0xff]
        %v666 = vsel %vm590, %v661, 0
        %v669 = vsel %vm590, %v662, 0
        %v672 = vsel %vm590, %v663, 0
        %v675 = vsel %vm590, %v664, 0
        %677 = vmatpush.msra.mxu0 0.0
        %678 = vmatpush.msra.mxu0 0.0
        %679 = vmatpush.msra.mxu0 0.0
        %680 = vmatpush.msra.mxu0 0.0
        %681 = vmatpush.msra.mxu0 0.0
        %682 = vmatpush.msra.mxu0 0.0
        %683 = vmatpush.msra.mxu0 0.0
        %684 = vmatpush.msra.mxu0 0.0
        %685 = vmatpush.msra.mxu0 0.0
        %686 = vmatpush.msra.mxu0 0.0
        %687 = vmatpush.msra.mxu0 0.0
        %688 = vmatpush.msra.mxu0 0.0
        %689 = vmatpush.msra.mxu0 %v568
        %690 = vmatpush.msra.mxu0 %v566
        %691 = vmatpush.msra.mxu0 %v564
        %692 = vmatpush.msra.mxu0 %v562
        %693 = vmatmul.f32.gmra.mxu0 %v666
        %v694 = vpop.f32.mrf.mxu0
        %v695 = vadd.f32 0.0, %v694
        %696 = vmatmul.f32.gmra.mxu0 %v669
        %v697 = vpop.f32.mrf.mxu0
        %v698 = vadd.f32 0.0, %v697
        %699 = vmatmul.f32.gmra.mxu0 %v672
        %v700 = vpop.f32.mrf.mxu0
        %v701 = vadd.f32 0.0, %v700
        %702 = vmatmul.f32.gmra.mxu0 %v675
        %v703 = vpop.f32.mrf.mxu0
        %v704 = vadd.f32 0.0, %v703
        %705 = vdwg.mxu0
        %706 = vmatpush.msra.mxu0 0.0
        %707 = vmatpush.msra.mxu0 0.0
        %708 = vmatpush.msra.mxu0 0.0
        %709 = vmatpush.msra.mxu0 0.0
        %710 = vmatpush.msra.mxu0 0.0
        %711 = vmatpush.msra.mxu0 0.0
        %712 = vmatpush.msra.mxu0 0.0
        %713 = vmatpush.msra.mxu0 0.0
        %714 = vmatpush.msra.mxu0 0.0
        %715 = vmatpush.msra.mxu0 0.0
        %716 = vmatpush.msra.mxu0 0.0
        %717 = vmatpush.msra.mxu0 0.0
        %718 = vmatpush.msra.mxu0 %v569
        %719 = vmatpush.msra.mxu0 %v567
        %720 = vmatpush.msra.mxu0 %v565
        %721 = vmatpush.msra.mxu0 %v563
        %722 = vmatmul.f32.gmra.mxu0 %v666
        %v723 = vpop.f32.mrf.mxu0
        %v724 = vadd.f32 0.0, %v723
        %725 = vmatmul.f32.gmra.mxu0 %v669
        %v726 = vpop.f32.mrf.mxu0
        %v727 = vadd.f32 0.0, %v726
        %728 = vmatmul.f32.gmra.mxu0 %v672
        %v729 = vpop.f32.mrf.mxu0
        %v730 = vadd.f32 0.0, %v729
        %731 = vmatmul.f32.gmra.mxu0 %v675
        %v732 = vpop.f32.mrf.mxu0
        %v733 = vadd.f32 0.0, %v732
        %734 = vdwg.mxu0
        %v735 = vld [vmem:[%s5] sm:$0xff]
        %v736 = vld [vmem:[%s5 + $0x8] sm:$0xff]
        %v737 = vld [vmem:[%s5 + $0x10] sm:$0xff]
        %v738 = vld [vmem:[%s5 + $0x18] sm:$0xff]
        %v739 = vsub.f32 %v621, %v695
        %v740 = vsub.f32 %v650, %v724
        %v741 = vsub.f32 %v624, %v698
        %v742 = vsub.f32 %v653, %v727
        %v743 = vsub.f32 %v627, %v701
        %v744 = vsub.f32 %v656, %v730
        %v745 = vsub.f32 %v630, %v704
        %v746 = vsub.f32 %v659, %v733
        %v747 = vadd.f32 %v739, %v578
        %v748 = vadd.f32 %v740, %v579
        %v749 = vadd.f32 %v741, %v580
        %v750 = vadd.f32 %v742, %v581
        %v751 = vadd.f32 %v743, %v582
        %v752 = vadd.f32 %v744, %v583
        %v753 = vadd.f32 %v745, %v584
        %v754 = vadd.f32 %v746, %v585
        %v755 = vld [vmem:[%s6] sm:$0xff]
        %v756 = vld [vmem:[%s6 + $0x8] sm:$0xff]
        %v757 = vld [vmem:[%s7] sm:$0xff]
        %v758 = vld [vmem:[%s7 + $0x8] sm:$0xff]
        %760 = vset.pattern.permute.xlu0 0
        %761 = vperm.xlu0 %760, %v757
        %v762 = vpop.permute.xlu0 %761
        %765 = vset.pattern.permute.xlu0 0
        %766 = vperm.xlu0 %765, %v758
        %v767 = vpop.permute.xlu0 %766
        %v770 = vsel %vm590, %v755, 0
        %v773 = vsel %vm590, %v756, 0
        %775 = vmatpush.msra.mxu0 0.0
        %776 = vmatpush.msra.mxu0 0.0
        %777 = vmatpush.msra.mxu0 0.0
        %778 = vmatpush.msra.mxu0 0.0
        %779 = vmatpush.msra.mxu0 0.0
        %780 = vmatpush.msra.mxu0 0.0
        %781 = vmatpush.msra.mxu0 0.0
        %782 = vmatpush.msra.mxu0 0.0
        %783 = vmatpush.msra.mxu0 0.0
        %784 = vmatpush.msra.mxu0 0.0
        %785 = vmatpush.msra.mxu0 0.0
        %786 = vmatpush.msra.mxu0 0.0
        %787 = vmatpush.msra.mxu0 %v753
        %788 = vmatpush.msra.mxu0 %v751
        %789 = vmatpush.msra.mxu0 %v749
        %790 = vmatpush.msra.mxu0 %v747
        %791 = vmatmul.f32.gmra.mxu0 %v770
        %v792 = vpop.f32.mrf.mxu0
        %v793 = vadd.f32 %v762, %v792
        %794 = vmatmul.f32.gmra.mxu0 %v773
        %v795 = vpop.f32.mrf.mxu0
        %v796 = vadd.f32 %v767, %v795
        %797 = vdwg.mxu0
        %798 = vmatpush.msra.mxu0 0.0
        %799 = vmatpush.msra.mxu0 0.0
        %800 = vmatpush.msra.mxu0 0.0
        %801 = vmatpush.msra.mxu0 0.0
        %802 = vmatpush.msra.mxu0 0.0
        %803 = vmatpush.msra.mxu0 0.0
        %804 = vmatpush.msra.mxu0 0.0
        %805 = vmatpush.msra.mxu0 0.0
        %806 = vmatpush.msra.mxu0 0.0
        %807 = vmatpush.msra.mxu0 0.0
        %808 = vmatpush.msra.mxu0 0.0
        %809 = vmatpush.msra.mxu0 0.0
        %810 = vmatpush.msra.mxu0 %v754
        %811 = vmatpush.msra.mxu0 %v752
        %812 = vmatpush.msra.mxu0 %v750
        %813 = vmatpush.msra.mxu0 %v748
        %814 = vmatmul.f32.gmra.mxu0 %v770
        %v815 = vpop.f32.mrf.mxu0
        %v816 = vadd.f32 %v762, %v815
        %817 = vmatmul.f32.gmra.mxu0 %v773
        %v818 = vpop.f32.mrf.mxu0
        %v819 = vadd.f32 %v767, %v818
        %820 = vdwg.mxu0
        %v821 = vmax.f32 %v793, 0.0
        %v822 = vmax.f32 %v816, 0.0
        %v823 = vmax.f32 %v796, 0.0
        %v824 = vmax.f32 %v819, 0.0
        %v825 = vld [vmem:[%s8] sm:$0xff]
        %v826 = vld [vmem:[%s8 + $0x8] sm:$0xff]
        %v827 = vld [vmem:[%s8 + $0x10] sm:$0xff]
        %v828 = vld [vmem:[%s8 + $0x18] sm:$0xff]
        %v829 = vld [vmem:[%s9] sm:$0xff]
        %v830 = vld [vmem:[%s9 + $0x8] sm:$0xff]
        %v831 = vld [vmem:[%s9 + $0x10] sm:$0xff]
        %v832 = vld [vmem:[%s9 + $0x18] sm:$0xff]
        %834 = vset.pattern.permute.xlu0 0
        %835 = vperm.xlu0 %834, %v829
        %v836 = vpop.permute.xlu0 %835
        %839 = vset.pattern.permute.xlu0 0
        %840 = vperm.xlu0 %839, %v830
        %v841 = vpop.permute.xlu0 %840
        %844 = vset.pattern.permute.xlu0 0
        %845 = vperm.xlu0 %844, %v831
        %v846 = vpop.permute.xlu0 %845
        %849 = vset.pattern.permute.xlu0 0
        %850 = vperm.xlu0 %849, %v832
        %v851 = vpop.permute.xlu0 %850
        %vm853 = vcmask 130048
        %v855 = vsel %vm853, %v825, 0
        %v858 = vsel %vm853, %v826, 0
        %v861 = vsel %vm853, %v827, 0
        %v864 = vsel %vm853, %v828, 0
        %866 = vmatpush.msra.mxu0 0.0
        %867 = vmatpush.msra.mxu0 0.0
        %868 = vmatpush.msra.mxu0 0.0
        %869 = vmatpush.msra.mxu0 0.0
        %870 = vmatpush.msra.mxu0 0.0
        %871 = vmatpush.msra.mxu0 0.0
        %872 = vmatpush.msra.mxu0 0.0
        %873 = vmatpush.msra.mxu0 0.0
        %874 = vmatpush.msra.mxu0 0.0
        %875 = vmatpush.msra.mxu0 0.0
        %876 = vmatpush.msra.mxu0 0.0
        %877 = vmatpush.msra.mxu0 0.0
        %878 = vmatpush.msra.mxu0 0.0
        %879 = vmatpush.msra.mxu0 0.0
        %880 = vmatpush.msra.mxu0 %v823
        %881 = vmatpush.msra.mxu0 %v821
        %882 = vmatmul.f32.gmra.mxu0 %v855
        %v883 = vpop.f32.mrf.mxu0
        %v884 = vadd.f32 %v836, %v883
        %885 = vmatmul.f32.gmra.mxu0 %v858
        %v886 = vpop.f32.mrf.mxu0
        %v887 = vadd.f32 %v841, %v886
        %888 = vmatmul.f32.gmra.mxu0 %v861
        %v889 = vpop.f32.mrf.mxu0
        %v890 = vadd.f32 %v846, %v889
        %891 = vmatmul.f32.gmra.mxu0 %v864
        %v892 = vpop.f32.mrf.mxu0
        %v893 = vadd.f32 %v851, %v892
        %894 = vdwg.mxu0
        %895 = vmatpush.msra.mxu0 0.0
        %896 = vmatpush.msra.mxu0 0.0
        %897 = vmatpush.msra.mxu0 0.0
        %898 = vmatpush.msra.mxu0 0.0
        %899 = vmatpush.msra.mxu0 0.0
        %900 = vmatpush.msra.mxu0 0.0
        %901 = vmatpush.msra.mxu0 0.0
        %902 = vmatpush.msra.mxu0 0.0
        %903 = vmatpush.msra.mxu0 0.0
        %904 = vmatpush.msra.mxu0 0.0
        %905 = vmatpush.msra.mxu0 0.0
        %906 = vmatpush.msra.mxu0 0.0
        %907 = vmatpush.msra.mxu0 0.0
        %908 = vmatpush.msra.mxu0 0.0
        %909 = vmatpush.msra.mxu0 %v824
        %910 = vmatpush.msra.mxu0 %v822
        %911 = vmatmul.f32.gmra.mxu0 %v855
        %v912 = vpop.f32.mrf.mxu0
        %v913 = vadd.f32 %v836, %v912
        %914 = vmatmul.f32.gmra.mxu0 %v858
        %v915 = vpop.f32.mrf.mxu0
        %v916 = vadd.f32 %v841, %v915
        %917 = vmatmul.f32.gmra.mxu0 %v861
        %v918 = vpop.f32.mrf.mxu0
        %v919 = vadd.f32 %v846, %v918
        %920 = vmatmul.f32.gmra.mxu0 %v864
        %v921 = vpop.f32.mrf.mxu0
        %v922 = vadd.f32 %v851, %v921
        %923 = vdwg.mxu0
        %v924 = vxor.u32 %v884, 2147483648
        %v925 = vxor.u32 %v913, 2147483648
        %v926 = vxor.u32 %v887, 2147483648
        %v927 = vxor.u32 %v916, 2147483648
        %v928 = vxor.u32 %v890, 2147483648
        %v929 = vxor.u32 %v919, 2147483648
        %v930 = vxor.u32 %v893, 2147483648
        %v931 = vxor.u32 %v922, 2147483648
        %v932 = vmul.f32 %v924, 1.442695
        %v933 = vpow.pop %v932
        %v934 = vmul.f32 %v925, 1.442695
        %v935 = vpow.pop %v934
        %v936 = vmul.f32 %v926, 1.442695
        %v937 = vpow.pop %v936
        %v938 = vmul.f32 %v927, 1.442695
        %v939 = vpow.pop %v938
        %v940 = vmul.f32 %v928, 1.442695
        %v941 = vpow.pop %v940
        %v942 = vmul.f32 %v929, 1.442695
        %v943 = vpow.pop %v942
        %v944 = vmul.f32 %v930, 1.442695
        %v945 = vpow.pop %v944
        %v946 = vmul.f32 %v931, 1.442695
        %v947 = vpow.pop %v946
        %v948 = vadd.f32 %v933, 1.0
        %v949 = vadd.f32 %v935, 1.0
        %v950 = vadd.f32 %v937, 1.0
        %v951 = vadd.f32 %v939, 1.0
        %v952 = vadd.f32 %v941, 1.0
        %v953 = vadd.f32 %v943, 1.0
        %v954 = vadd.f32 %v945, 1.0
        %v955 = vadd.f32 %v947, 1.0
        %v956 = vrcp.pop %v948
        %v957 = vmul.f32 %v948, %v956
        %v958 = vsub.f32 1.0, %v957
        %v959 = vmul.f32 %v956, %v958
        %v960 = vadd.f32 %v956, %v959
        %vm961 = vweird.f32 %v948
        %vm962 = vweird.f32 %v956
        %vm963 = vmor %vm961, %vm962
        %v964 = vsel %vm963, %v956, %v960
        %v965 = vand.u32 2147483647, %v948
        %vm966 = vcmp.eq.f32.partialorder %v965, 8.507059e+37
        %v967 = vand.u32 %v948, 2147483648
        %v968 = vor.u32 1.1754944e-38, %v967
        %v969 = vsel %vm966, %v968, %v964
        %v970 = vmul.f32 1.0, %v969
        %v971 = vrcp.pop %v949
        %v972 = vmul.f32 %v949, %v971
        %v973 = vsub.f32 1.0, %v972
        %v974 = vmul.f32 %v971, %v973
        %v975 = vadd.f32 %v971, %v974
        %vm976 = vweird.f32 %v949
        %vm977 = vweird.f32 %v971
        %vm978 = vmor %vm976, %vm977
        %v979 = vsel %vm978, %v971, %v975
        %v980 = vand.u32 2147483647, %v949
        %vm981 = vcmp.eq.f32.partialorder %v980, 8.507059e+37
        %v982 = vand.u32 %v949, 2147483648
        %v983 = vor.u32 1.1754944e-38, %v982
        %v984 = vsel %vm981, %v983, %v979
        %v985 = vmul.f32 1.0, %v984
        %v986 = vrcp.pop %v950
        %v987 = vmul.f32 %v950, %v986
        %v988 = vsub.f32 1.0, %v987
        %v989 = vmul.f32 %v986, %v988
        %v990 = vadd.f32 %v986, %v989
        %vm991 = vweird.f32 %v950
        %vm992 = vweird.f32 %v986
        %vm993 = vmor %vm991, %vm992
        %v994 = vsel %vm993, %v986, %v990
        %v995 = vand.u32 2147483647, %v950
        %vm996 = vcmp.eq.f32.partialorder %v995, 8.507059e+37
        %v997 = vand.u32 %v950, 2147483648
        %v998 = vor.u32 1.1754944e-38, %v997
        %v999 = vsel %vm996, %v998, %v994
        %v1000 = vmul.f32 1.0, %v999
        %v1001 = vrcp.pop %v951
        %v1002 = vmul.f32 %v951, %v1001
        %v1003 = vsub.f32 1.0, %v1002
        %v1004 = vmul.f32 %v1001, %v1003
        %v1005 = vadd.f32 %v1001, %v1004
        %vm1006 = vweird.f32 %v951
        %vm1007 = vweird.f32 %v1001
        %vm1008 = vmor %vm1006, %vm1007
        %v1009 = vsel %vm1008, %v1001, %v1005
        %v1010 = vand.u32 2147483647, %v951
        %vm1011 = vcmp.eq.f32.partialorder %v1010, 8.507059e+37
        %v1012 = vand.u32 %v951, 2147483648
        %v1013 = vor.u32 1.1754944e-38, %v1012
        %v1014 = vsel %vm1011, %v1013, %v1009
        %v1015 = vmul.f32 1.0, %v1014
        %v1016 = vrcp.pop %v952
        %v1017 = vmul.f32 %v952, %v1016
        %v1018 = vsub.f32 1.0, %v1017
        %v1019 = vmul.f32 %v1016, %v1018
        %v1020 = vadd.f32 %v1016, %v1019
        %vm1021 = vweird.f32 %v952
        %vm1022 = vweird.f32 %v1016
        %vm1023 = vmor %vm1021, %vm1022
        %v1024 = vsel %vm1023, %v1016, %v1020
        %v1025 = vand.u32 2147483647, %v952
        %vm1026 = vcmp.eq.f32.partialorder %v1025, 8.507059e+37
        %v1027 = vand.u32 %v952, 2147483648
        %v1028 = vor.u32 1.1754944e-38, %v1027
        %v1029 = vsel %vm1026, %v1028, %v1024
        %v1030 = vmul.f32 1.0, %v1029
        %v1031 = vrcp.pop %v953
        %v1032 = vmul.f32 %v953, %v1031
        %v1033 = vsub.f32 1.0, %v1032
        %v1034 = vmul.f32 %v1031, %v1033
        %v1035 = vadd.f32 %v1031, %v1034
        %vm1036 = vweird.f32 %v953
        %vm1037 = vweird.f32 %v1031
        %vm1038 = vmor %vm1036, %vm1037
        %v1039 = vsel %vm1038, %v1031, %v1035
        %v1040 = vand.u32 2147483647, %v953
        %vm1041 = vcmp.eq.f32.partialorder %v1040, 8.507059e+37
        %v1042 = vand.u32 %v953, 2147483648
        %v1043 = vor.u32 1.1754944e-38, %v1042
        %v1044 = vsel %vm1041, %v1043, %v1039
        %v1045 = vmul.f32 1.0, %v1044
        %v1046 = vrcp.pop %v954
        %v1047 = vmul.f32 %v954, %v1046
        %v1048 = vsub.f32 1.0, %v1047
        %v1049 = vmul.f32 %v1046, %v1048
        %v1050 = vadd.f32 %v1046, %v1049
        %vm1051 = vweird.f32 %v954
        %vm1052 = vweird.f32 %v1046
        %vm1053 = vmor %vm1051, %vm1052
        %v1054 = vsel %vm1053, %v1046, %v1050
        %v1055 = vand.u32 2147483647, %v954
        %vm1056 = vcmp.eq.f32.partialorder %v1055, 8.507059e+37
        %v1057 = vand.u32 %v954, 2147483648
        %v1058 = vor.u32 1.1754944e-38, %v1057
        %v1059 = vsel %vm1056, %v1058, %v1054
        %v1060 = vmul.f32 1.0, %v1059
        %v1061 = vrcp.pop %v955
        %v1062 = vmul.f32 %v955, %v1061
        %v1063 = vsub.f32 1.0, %v1062
        %v1064 = vmul.f32 %v1061, %v1063
        %v1065 = vadd.f32 %v1061, %v1064
        %vm1066 = vweird.f32 %v955
        %vm1067 = vweird.f32 %v1061
        %vm1068 = vmor %vm1066, %vm1067
        %v1069 = vsel %vm1068, %v1061, %v1065
        %v1070 = vand.u32 2147483647, %v955
        %vm1071 = vcmp.eq.f32.partialorder %v1070, 8.507059e+37
        %v1072 = vand.u32 %v955, 2147483648
        %v1073 = vor.u32 1.1754944e-38, %v1072
        %v1074 = vsel %vm1071, %v1073, %v1069
        %v1075 = vmul.f32 1.0, %v1074
        %v1077 = vsel %vm590, %v735, 0
        %v1080 = vsel %vm590, %v736, 0
        %v1083 = vsel %vm590, %v737, 0
        %v1086 = vsel %vm590, %v738, 0
        %1088 = vmatpush.msra.mxu0 0.0
        %1089 = vmatpush.msra.mxu0 0.0
        %1090 = vmatpush.msra.mxu0 0.0
        %1091 = vmatpush.msra.mxu0 0.0
        %1092 = vmatpush.msra.mxu0 0.0
        %1093 = vmatpush.msra.mxu0 0.0
        %1094 = vmatpush.msra.mxu0 0.0
        %1095 = vmatpush.msra.mxu0 0.0
        %1096 = vmatpush.msra.mxu0 0.0
        %1097 = vmatpush.msra.mxu0 0.0
        %1098 = vmatpush.msra.mxu0 0.0
        %1099 = vmatpush.msra.mxu0 0.0
        %1100 = vmatpush.msra.mxu0 %v630
        %1101 = vmatpush.msra.mxu0 %v627
        %1102 = vmatpush.msra.mxu0 %v624
        %1103 = vmatpush.msra.mxu0 %v621
        %1104 = vmatmul.f32.gmra.mxu0 %v1077
        %v1105 = vpop.f32.mrf.mxu0
        %v1106 = vadd.f32 %v578, %v1105
        %1107 = vmatmul.f32.gmra.mxu0 %v1080
        %v1108 = vpop.f32.mrf.mxu0
        %v1109 = vadd.f32 %v580, %v1108
        %1110 = vmatmul.f32.gmra.mxu0 %v1083
        %v1111 = vpop.f32.mrf.mxu0
        %v1112 = vadd.f32 %v582, %v1111
        %1113 = vmatmul.f32.gmra.mxu0 %v1086
        %v1114 = vpop.f32.mrf.mxu0
        %v1115 = vadd.f32 %v584, %v1114
        %1116 = vdwg.mxu0
        %1117 = vmatpush.msra.mxu0 0.0
        %1118 = vmatpush.msra.mxu0 0.0
        %1119 = vmatpush.msra.mxu0 0.0
        %1120 = vmatpush.msra.mxu0 0.0
        %1121 = vmatpush.msra.mxu0 0.0
        %1122 = vmatpush.msra.mxu0 0.0
        %1123 = vmatpush.msra.mxu0 0.0
        %1124 = vmatpush.msra.mxu0 0.0
        %1125 = vmatpush.msra.mxu0 0.0
        %1126 = vmatpush.msra.mxu0 0.0
        %1127 = vmatpush.msra.mxu0 0.0
        %1128 = vmatpush.msra.mxu0 0.0
        %1129 = vmatpush.msra.mxu0 %v659
        %1130 = vmatpush.msra.mxu0 %v656
        %1131 = vmatpush.msra.mxu0 %v653
        %1132 = vmatpush.msra.mxu0 %v650
        %1133 = vmatmul.f32.gmra.mxu0 %v1077
        %v1134 = vpop.f32.mrf.mxu0
        %v1135 = vadd.f32 %v579, %v1134
        %1136 = vmatmul.f32.gmra.mxu0 %v1080
        %v1137 = vpop.f32.mrf.mxu0
        %v1138 = vadd.f32 %v581, %v1137
        %1139 = vmatmul.f32.gmra.mxu0 %v1083
        %v1140 = vpop.f32.mrf.mxu0
        %v1141 = vadd.f32 %v583, %v1140
        %1142 = vmatmul.f32.gmra.mxu0 %v1086
        %v1143 = vpop.f32.mrf.mxu0
        %v1144 = vadd.f32 %v585, %v1143
        %1145 = vdwg.mxu0
        %v1146 = vmul.f32 %v1106, %v970
        %v1147 = vmul.f32 %v1135, %v985
        %v1148 = vmul.f32 %v1109, %v1000
        %v1149 = vmul.f32 %v1138, %v1015
        %v1150 = vmul.f32 %v1112, %v1030
        %v1151 = vmul.f32 %v1141, %v1045
        %v1152 = vmul.f32 %v1115, %v1060
        %v1153 = vmul.f32 %v1144, %v1075
        %v1154 = vld [vmem:[#allocation8] sm:$0xff]
        %v1155 = vld [vmem:[#allocation8 + $0x8] sm:$0xff]
        %v1156 = vld [vmem:[#allocation8 + $0x10] sm:$0xff]
        %v1157 = vld [vmem:[#allocation8 + $0x18] sm:$0xff]
        %v1158 = vld [vmem:[%s11] sm:$0xff]
        %v1159 = vld [vmem:[%s11 + $0x8] sm:$0xff]
        %v1160 = vld [vmem:[%s11 + $0x10] sm:$0xff]
        %v1161 = vld [vmem:[%s11 + $0x18] sm:$0xff]
        %1163 = vset.pattern.permute.xlu0 0
        %1164 = vperm.xlu0 %1163, %v1158
        %v1165 = vpop.permute.xlu0 %1164
        %1168 = vset.pattern.permute.xlu0 0
        %1169 = vperm.xlu0 %1168, %v1159
        %v1170 = vpop.permute.xlu0 %1169
        %1173 = vset.pattern.permute.xlu0 0
        %1174 = vperm.xlu0 %1173, %v1160
        %v1175 = vpop.permute.xlu0 %1174
        %1178 = vset.pattern.permute.xlu0 0
        %1179 = vperm.xlu0 %1178, %v1161
        %v1180 = vpop.permute.xlu0 %1179
        %v1183 = vsel %vm590, %v1154, 0
        %v1186 = vsel %vm590, %v1155, 0
        %v1189 = vsel %vm590, %v1156, 0
        %v1192 = vsel %vm590, %v1157, 0
        %1194 = vmatpush.msra.mxu0 0.0
        %1195 = vmatpush.msra.mxu0 0.0
        %1196 = vmatpush.msra.mxu0 0.0
        %1197 = vmatpush.msra.mxu0 0.0
        %1198 = vmatpush.msra.mxu0 0.0
        %1199 = vmatpush.msra.mxu0 0.0
        %1200 = vmatpush.msra.mxu0 0.0
        %1201 = vmatpush.msra.mxu0 0.0
        %1202 = vmatpush.msra.mxu0 0.0
        %1203 = vmatpush.msra.mxu0 0.0
        %1204 = vmatpush.msra.mxu0 0.0
        %1205 = vmatpush.msra.mxu0 0.0
        %1206 = vmatpush.msra.mxu0 %v1152
        %1207 = vmatpush.msra.mxu0 %v1150
        %1208 = vmatpush.msra.mxu0 %v1148
        %1209 = vmatpush.msra.mxu0 %v1146
        %1210 = vmatmul.f32.gmra.mxu0 %v1183
        %v1211 = vpop.f32.mrf.mxu0
        %v1212 = vadd.f32 %v1165, %v1211
        %1213 = vmatmul.f32.gmra.mxu0 %v1186
        %v1214 = vpop.f32.mrf.mxu0
        %v1215 = vadd.f32 %v1170, %v1214
        %1216 = vmatmul.f32.gmra.mxu0 %v1189
        %v1217 = vpop.f32.mrf.mxu0
        %v1218 = vadd.f32 %v1175, %v1217
        %1219 = vmatmul.f32.gmra.mxu0 %v1192
        %v1220 = vpop.f32.mrf.mxu0
        %v1221 = vadd.f32 %v1180, %v1220
        %1222 = vdwg.mxu0
        %1223 = vmatpush.msra.mxu0 0.0
        %1224 = vmatpush.msra.mxu0 0.0
        %1225 = vmatpush.msra.mxu0 0.0
        %1226 = vmatpush.msra.mxu0 0.0
        %1227 = vmatpush.msra.mxu0 0.0
        %1228 = vmatpush.msra.mxu0 0.0
        %1229 = vmatpush.msra.mxu0 0.0
        %1230 = vmatpush.msra.mxu0 0.0
        %1231 = vmatpush.msra.mxu0 0.0
        %1232 = vmatpush.msra.mxu0 0.0
        %1233 = vmatpush.msra.mxu0 0.0
        %1234 = vmatpush.msra.mxu0 0.0
        %1235 = vmatpush.msra.mxu0 %v1153
        %1236 = vmatpush.msra.mxu0 %v1151
        %1237 = vmatpush.msra.mxu0 %v1149
        %1238 = vmatpush.msra.mxu0 %v1147
        %1239 = vmatmul.f32.gmra.mxu0 %v1183
        %v1240 = vpop.f32.mrf.mxu0
        %v1241 = vadd.f32 %v1165, %v1240
        %1242 = vmatmul.f32.gmra.mxu0 %v1186
        %v1243 = vpop.f32.mrf.mxu0
        %v1244 = vadd.f32 %v1170, %v1243
        %1245 = vmatmul.f32.gmra.mxu0 %v1189
        %v1246 = vpop.f32.mrf.mxu0
        %v1247 = vadd.f32 %v1175, %v1246
        %1248 = vmatmul.f32.gmra.mxu0 %v1192
        %v1249 = vpop.f32.mrf.mxu0
        %v1250 = vadd.f32 %v1180, %v1249
        %1251 = vdwg.mxu0
        %1252 = vst [vmem:[%s557] sm:$0xff] %v1212
        %1253 = vst [vmem:[%s557 + $0x8] sm:$0xff] %v1241
        %1254 = vst [vmem:[%s557 + $0x10] sm:$0xff] %v1215
        %1255 = vst [vmem:[%s557 + $0x18] sm:$0xff] %v1244
        %1256 = vst [vmem:[%s557 + $0x20] sm:$0xff] %v1218
        %1257 = vst [vmem:[%s557 + $0x28] sm:$0xff] %v1247
        %1258 = vst [vmem:[%s557 + $0x30] sm:$0xff] %v1221
        %1259 = vst [vmem:[%s557 + $0x38] sm:$0xff] %v1250
        %s1260 = sand.u32 %s328, 1
        %s1261 = scalar_lea.sflag [#allocation4], %s1260
        %s1262 = sand.u32 %s328, 1
        %s1263 = smul.addr %s1262, 64
        %s1264 = scalar_lea.vmem [#allocation10], %s1263
        // Predicated region
        $region85: #{tpu_custom_call.1} parent=67 // pred_check
          %p1265 = pneg %p338
        $region86: #{tpu_custom_call.1} parent=67 // pred_check_branch
          %1267 = sbr.rel (%p1265) target = $region88
        $region87: #{tpu_custom_call.1} parent=67 // pred_region
          %s1268 = smul.u32 2, %s38
          %1270 = vsyncadd %s1261, 0
          %s1271 = smul.addr %s37, 8
          %s1272 = sadd.s32 %s1268, %s1271
          %s1273 = smul.addr %s1272, 8
          %s1274 = scalar_lea.hbm %s12, %s1273
          %s1275 = sshll.u32 %s1264, 4
          %s1276 = int_to_ptr.vmem [resolvable:$true] %s1275
          %s1277 = sshll.u32 %s1274, 4
          %s1278 = int_to_ptr.hbm [resolvable:$true] %s1277
          %1283 = dma.vmem_to_hbm [thread:$0]  %s1276, 1024, %s1278, %s1261, 256, 256, 16
        $region88: #{tpu_custom_call.1} parent=67 // pred_fallthru
          _
      $region68: #{tpu_custom_call.1} parent=5 // pred_fallthru
        _
      %p1284 = scmp.le.s32.totalorder 2, %s28
      // Predicated region
      $region89: #{tpu_custom_call.1} parent=5 // pred_check
        %p1285 = pneg %p1284
      $region90: #{tpu_custom_call.1} parent=5 // pred_check_branch
        %1287 = sbr.rel (%p1285) target = $region92
      $region91: #{tpu_custom_call.1} parent=5 // pred_region
        %s1288 = ssub.s32 %s28, 2
        // Predicated region
        $region93: #{tpu_custom_call.1} parent=91 // pred_check
          %p1289 = pneg %p344
        $region94: #{tpu_custom_call.1} parent=91 // pred_check_branch
          %1291 = sbr.rel (%p1289) target = $region96
        $region95: #{tpu_custom_call.1} parent=91 // pred_region
          %s1292 = sand.u32 %s329, 1
          %s1293 = scalar_lea.sflag [#allocation4], %s1292
          %s1294 = sand.u32 %s329, 1
          %s1295 = smul.addr %s1294, 64
          %s1296 = scalar_lea.vmem [#allocation10], %s1295
          %1298 = dma.done %s1293, 1024
        $region96: #{tpu_custom_call.1} parent=91 // pred_fallthru
          _
      $region92: #{tpu_custom_call.1} parent=5 // pred_fallthru
        _
    $region6: #{tpu_custom_call.1} parent=1 // loop_footer
      %s32 = sadd.s32 1, %s28
    $region7: #{tpu_custom_call.1} parent=1 // loop_footer_branch
      %27 = sbr.rel target = $region3
    $region8: #{tpu_custom_call.1} parent=1 // loop_exit
      _
    %1299 = vsyncpa [#allocation3], 1
    %s1300 = scalar_lea.sflag [#allocation3], 1
    %1301 = vsyncpa %s1300, 1
    %1302 = vsyncpa [#allocation6], 1
    %s1303 = scalar_lea.sflag [#allocation6], 1
    %1304 = vsyncpa %s1303, 1
    %1305 = vsyncpa [#allocation9], 1
    %1306 = vsyncpa [#allocation4], 1
    %s1307 = scalar_lea.sflag [#allocation4], 1
    %1308 = vsyncpa %s1307, 1

</llo_original>
